<compile_context>
chip_gen: v7x
topology: tpu7x:2x2x1
jax: 0.10.0
libtpu: 0.0.40
codegen_flags: <defaults>
</compile_context>

<pallas_src>
import math

import jax
import jax.numpy as jnp
import numpy as np
from jax import lax
from jax.experimental import pallas as pl
from jax.experimental.pallas import tpu as pltpu


# ----------------------------- config ---------------------------------------
HIDDEN = 32
N_HEADS = 4
HEAD = HIDDEN // N_HEADS          # 8
HALF = HEAD // 2                  # 4
USE_BIAS = True
USE_ROPE = True
BASE = 10000.0
MAX_F = 64
B = 2
T = 8
BT = B * T
NEG_INF = -1e30

# Constant-slab row layout (every block starts on an 8-sublane boundary).
SLAB_COLS = 5 * HIDDEN                      # 160
ROW_WF = 0                                  # fused QKV(+rot) weight [H, 5H]
ROW_BF = HIDDEN                             # 32: fused bias row     [1, 5H]
ROW_WO = ROW_BF + 8                         # 40: out-proj weight    [H, H]
ROW_BO = ROW_WO + HIDDEN                    # 72: out-proj bias row  [1, H]
ROW_MV = ROW_BO + 8                         # 80: head-block mask    [NH*BT, H]
SLAB_ROWS = ROW_MV + N_HEADS * BT           # 144


# ----------------------------- kernel ---------------------------------------
def neural_attention_kernel(
    xct_ref,      # [BT, 3H]        f32   [x | cos | sin] (cos/sin tiled per head)
    bias_ref,     # [BT, NH*BT]     f32   additive mask bias (0 / NEG_INF),
                  #                       cross-batch columns = NEG_INF
    slab_ref,     # [144, 5H]       f32   packed constants (see layout above)
    o_ref,        # [BT, H]
):
    H = HIDDEN
    xct = xct_ref[...]
    x = xct[:, 0:H]
    cos = xct[:, H:2 * H]
    sin = xct[:, 2 * H:3 * H]

    w_f = slab_ref[ROW_WF:ROW_WF + H, :]                    # [H, 5H]
    b_f = slab_ref[ROW_BF:ROW_BF + 1, :]                    # [1, 5H]
    wo = slab_ref[ROW_WO:ROW_WO + H, 0:H]                   # [H, H]
    bo = slab_ref[ROW_BO:ROW_BO + 1, 0:H]                   # [1, H]
    mv = slab_ref[ROW_MV:ROW_MV + N_HEADS * BT, 0:H]        # [NH*BT, H] 0/1 mask

    # One fused MXU push: [q | k | v | rotate_half(q) | rotate_half(k)]
    # (1/sqrt(head_size) already folded into the q columns).
    fused = jnp.dot(x, w_f, preferred_element_type=jnp.float32) + b_f

    # RoPE at full width; rotate_half was folded into the weights -> pure VPU.
    q = fused[:, 0 * H:1 * H] * cos + fused[:, 3 * H:4 * H] * sin
    k = fused[:, 1 * H:2 * H] * cos + fused[:, 4 * H:5 * H] * sin
    v = fused[:, 2 * H:3 * H]

    # Head-replicated, head-block-masked K and V.
    # Row r = h*BT + (b*T + j) holds k/v of token (b, j), zeroed outside head h.
    k_rep = jnp.concatenate([k] * N_HEADS, axis=0) * mv     # [NH*BT, H]
    v_rep = jnp.concatenate([v] * N_HEADS, axis=0) * mv     # [NH*BT, H]

    # All (batch, head) attention scores in ONE MXU push:
    #   s[b*T+i, h*BT + b'*T + j] = q_h(b,i) . k_h(b',j)
    # Cross-batch (b != b') columns are removed by the additive bias below.
    s = lax.dot_general(q, k_rep, (((1,), (1,)), ((), ())),
                        preferred_element_type=jnp.float32)   # [BT, NH*BT]
    s = s + bias_ref[...]

    # Row-global max: constant shift per row within every head block, so the
    # per-head softmax is exact (only extreme cross-head logit spread could
    # underflow a denominator).  Fully-masked rows would give uniform
    # attention, same as the reference (diagonal is forced unmasked here).
    s = s - jnp.max(s, axis=-1, keepdims=True)
    e = jnp.exp(s)

    # Numerator and per-head denominator (broadcast over that head's columns)
    # in ONE MXU push against [V_rep | head-mask].
    rhs = jnp.concatenate([v_rep, mv], axis=1)                # [NH*BT, 2H]
    nd = jnp.dot(e, rhs, preferred_element_type=jnp.float32)  # [BT, 2H]
    attn = nd[:, 0:H] * pl.reciprocal(nd[:, H:2 * H], approx=False)

    # Output projection (dropout is identity in eval mode).
    y = jnp.dot(attn, wo, preferred_element_type=jnp.float32) + bo
    o_ref[...] = y.astype(o_ref.dtype)


# ----------------------------- parameter packing -----------------------------
def _rotate_half_matrix():
    """[H, H] block-diagonal R such that (x @ R) == rotate_half(x) per head."""
    R = np.zeros((HIDDEN, HIDDEN), np.float32)
    for h in range(N_HEADS):
        off = h * HEAD
        for j in range(HALF):
            R[off + j + HALF, off + j] = -1.0   # out[:, j]      = -x[:, j+HALF]
            R[off + j, off + j + HALF] = 1.0    # out[:, j+HALF] = +x[:, j]
    return R


def _head_block_mask():
    """mv[h*BT + r, c] = 1 iff column c belongs to head h."""
    mv = np.zeros((N_HEADS * BT, HIDDEN), np.float32)
    for h in range(N_HEADS):
        mv[h * BT:(h + 1) * BT, h * HEAD:(h + 1) * HEAD] = 1.0
    return mv


def pack_params(params):
    """One-time (load-time) packing into a single constant slab."""
    wq, bq, wk, bk, wv, bv, wo, bo = (np.asarray(p, np.float32) for p in params)
    R = _rotate_half_matrix()
    scale = 1.0 / math.sqrt(HEAD)
    wqs, bqs = wq * scale, bq * scale                       # fold attn scale into Q
    w_fused = np.concatenate([wqs, wk, wv, wqs @ R, wk @ R], axis=1)   # [H, 5H]
    b_fused = np.concatenate([bqs, bk, bv, bqs @ R, bk @ R], axis=1)   # [1, 5H]

    slab = np.zeros((SLAB_ROWS, SLAB_COLS), np.float32)
    slab[ROW_WF:ROW_WF + HIDDEN, :] = w_fused
    slab[ROW_BF, :] = b_fused[0]
    slab[ROW_WO:ROW_WO + HIDDEN, 0:HIDDEN] = wo
    slab[ROW_BO, 0:HIDDEN] = bo[0]
    slab[ROW_MV:ROW_MV + N_HEADS * BT, 0:HIDDEN] = _head_block_mask()
    return jnp.asarray(slab)


# ----------------------------- wrapper ---------------------------------------
def neural_attention(x, attn_mask, cos_g, sin_g, slab):
    """x: [B,T,H] f32, attn_mask: [B,T,T] 0/1, cos_g/sin_g: [B,T,HEAD]."""
    Bn, Tn, Hn = x.shape
    bt = Bn * Tn

    # Per-call glue (cheap, plain JAX): flatten batch, tile cos/sin per head,
    # pack [x | cos | sin] into one array, build the additive mask bias whose
    # cross-batch blocks are NEG_INF (so the kernel does all batches at once).
    x2d = x.reshape(bt, Hn)
    cos_full = jnp.tile(cos_g, (1, 1, N_HEADS)).reshape(bt, Hn)
    sin_full = jnp.tile(sin_g, (1, 1, N_HEADS)).reshape(bt, Hn)
    xct = jnp.concatenate([x2d, cos_full, sin_full], axis=1)          # [BT, 3H]

    mask_bias = jnp.where(attn_mask > 0.5, 0.0, NEG_INF).astype(jnp.float32)
    same_batch = (jnp.arange(Bn)[:, None, None, None]
                  == jnp.arange(Bn)[None, None, :, None])             # [B,1,B,1]
    bias4 = jnp.where(same_batch, mask_bias[:, :, None, :], NEG_INF)  # [B,T,B,T]
    bias2 = bias4.reshape(bt, bt)
    bias_full = jnp.broadcast_to(
        bias2[:, None, :], (bt, N_HEADS, bt)).reshape(bt, N_HEADS * bt)

    full = lambda i: (0, 0)

    grid_spec = pltpu.PrefetchScalarGridSpec(
        num_scalar_prefetch=0,
        grid=(1,),                      # B*T=16 rows -> single step, no grid split
        in_specs=[
            pl.BlockSpec((bt, 3 * Hn), full),             # [x | cos | sin]
            pl.BlockSpec((bt, N_HEADS * bt), full),       # additive mask bias
            pl.BlockSpec((SLAB_ROWS, SLAB_COLS), full),   # packed constants
        ],
        out_specs=pl.BlockSpec((bt, Hn), full),
    )

    out2d = pl.pallas_call(
        neural_attention_kernel,
        out_shape=jax.ShapeDtypeStruct((bt, Hn), x.dtype),
        grid_spec=grid_spec,
        compiler_params=pltpu.CompilerParams(
            dimension_semantics=("arbitrary",)),
    )(xct, bias_full, slab)

    return out2d.reshape(Bn, Tn, Hn)


# ----------------------------- reference (pure JAX) ---------------------------
def reference(x, attn_mask, cos_g, sin_g, params):
    wq, bq, wk, bk, wv, bv, wo, bo = params
    Bn, Tn, Hn = x.shape
    q = (x @ wq + bq).reshape(Bn, Tn, N_HEADS, HEAD).transpose(0, 2, 1, 3)
    k = (x @ wk + bk).reshape(Bn, Tn, N_HEADS, HEAD).transpose(0, 2, 1, 3)
    v = (x @ wv + bv).reshape(Bn, Tn, N_HEADS, HEAD).transpose(0, 2, 1, 3)
    if USE_ROPE:
        c = cos_g[:, None, :, :]
        s = sin_g[:, None, :, :]
        rot = lambda t: jnp.concatenate(
            [-t[..., HEAD // 2:], t[..., :HEAD // 2]], axis=-1)
        q = q * c + rot(q) * s
        k = k * c + rot(k) * s
    scores = jnp.einsum("bhqd,bhkd->bhqk", q, k) / jnp.sqrt(jnp.float32(HEAD))
    mask = (attn_mask > 0.5)[:, None, :, :]
    scores = jnp.where(mask, scores, NEG_INF)
    p = jax.nn.softmax(scores, axis=-1)
    out = jnp.einsum("bhqk,bhkd->bhqd", p, v)
    out = out.transpose(0, 2, 1, 3).reshape(Bn, Tn, Hn)
    return out @ wo + bo


# ----------------------------- main -------------------------------------------
if __name__ == "__main__":
    key = jax.random.PRNGKey(0)
    keys = jax.random.split(key, 12)

    # deterministic synthetic parameters (pre-transposed to [in, out])
    scl = 0.1
    wq = jax.random.normal(keys[0], (HIDDEN, HIDDEN), jnp.float32) * scl
    wk = jax.random.normal(keys[1], (HIDDEN, HIDDEN), jnp.float32) * scl
    wv = jax.random.normal(keys[2], (HIDDEN, HIDDEN), jnp.float32) * scl
    wo = jax.random.normal(keys[3], (HIDDEN, HIDDEN), jnp.float32) * scl
    bq = jax.random.normal(keys[4], (1, HIDDEN), jnp.float32) * scl
    bk = jax.random.normal(keys[5], (1, HIDDEN), jnp.float32) * scl
    bv = jax.random.normal(keys[6], (1, HIDDEN), jnp.float32) * scl
    bo = jax.random.normal(keys[7], (1, HIDDEN), jnp.float32) * scl
    params = (wq, bq, wk, bk, wv, bv, wo, bo)
    slab = pack_params(params)              # one-time, load-time packing

    # inputs
    x = jax.random.normal(keys[8], (B, T, HIDDEN), jnp.float32)
    # 0/1 attention mask [B,T,T] with guaranteed-unmasked diagonal
    rand_mask = (jax.random.uniform(keys[9], (B, T, T)) > 0.3).astype(jnp.float32)
    eye = jnp.eye(T, dtype=jnp.float32)[None]
    attn_mask = jnp.maximum(rand_mask, eye)
    # timestamps for RoPE
    timestamp = jnp.tile(jnp.arange(T, dtype=jnp.int32)[None], (B, 1))

    # RoPE tables (get_cos_sin) + gather by timestamp (plain-JAX glue)
    inv_freq = 1.0 / (BASE ** (jnp.arange(0, HEAD, 2, dtype=jnp.float32) / HEAD))
    t = jnp.arange(MAX_F, dtype=jnp.float32)
    freqs = jnp.einsum("i,j->ij", t, inv_freq)
    emb = jnp.concatenate([freqs, freqs], axis=-1)          # [MAX_F, HEAD]
    cos_tab, sin_tab = jnp.cos(emb), jnp.sin(emb)
    cos_g = cos_tab[timestamp]                               # [B, T, HEAD]
    sin_g = sin_tab[timestamp]

    out = neural_attention(x, attn_mask, cos_g, sin_g, slab)
    out = jax.block_until_ready(out)

    ref = reference(x, attn_mask, cos_g, sin_g, params)
    np.testing.assert_allclose(np.asarray(out), np.asarray(ref),
                               rtol=1e-3, atol=1e-3)

    print("KERNEL_OK")
</pallas_src>

<mosaic_0001>
module attributes {stable_mosaic.version = 11 : i64} {
  func.func @neural_attention_kernel(%arg0: i32, %arg1: memref<16x96xf32, #tpu.memory_space<vmem>>, %arg2: memref<16x64xf32, #tpu.memory_space<vmem>>, %arg3: memref<144x160xf32, #tpu.memory_space<vmem>>, %arg4: memref<16x32xf32, #tpu.memory_space<vmem>>) attributes {dimension_semantics = [#tpu.dimension_semantics<arbitrary>], iteration_bounds = array<i64: 1>, scalar_prefetch = 0 : i64, scratch_operands = 0 : i64, tpu.core_type = #tpu.core_type<tc>, window_params = [{pipeline_mode = #tpu.pipeline_mode<synchronous>, transform_indices = @transform_0, window_bounds = array<i64: 16, 96>}, {pipeline_mode = #tpu.pipeline_mode<synchronous>, transform_indices = @transform_1, window_bounds = array<i64: 16, 64>}, {pipeline_mode = #tpu.pipeline_mode<synchronous>, transform_indices = @transform_2, window_bounds = array<i64: 144, 160>}, {pipeline_mode = #tpu.pipeline_mode<synchronous>, transform_indices = @transform_3, window_bounds = array<i64: 16, 32>}]} {
    %c0 = arith.constant 0 : index
    %c0_0 = arith.constant 0 : index
    %0 = vector.load %arg1[%c0, %c0_0] : memref<16x96xf32, #tpu.memory_space<vmem>>, vector<16x96xf32>
    %1 = vector.extract_strided_slice %0 {offsets = [0, 0], sizes = [16, 32], strides = [1, 1]} : vector<16x96xf32> to vector<16x32xf32>
    %2 = vector.extract_strided_slice %0 {offsets = [0, 32], sizes = [16, 32], strides = [1, 1]} : vector<16x96xf32> to vector<16x32xf32>
    %3 = vector.extract_strided_slice %0 {offsets = [0, 64], sizes = [16, 32], strides = [1, 1]} : vector<16x96xf32> to vector<16x32xf32>
    %c0_1 = arith.constant 0 : index
    %c0_2 = arith.constant 0 : index
    %4 = vector.load %arg3[%c0_1, %c0_2] : memref<144x160xf32, #tpu.memory_space<vmem>>, vector<32x160xf32>
    %c32 = arith.constant 32 : index
    %c0_3 = arith.constant 0 : index
    %5 = vector.load %arg3[%c32, %c0_3] : memref<144x160xf32, #tpu.memory_space<vmem>>, vector<1x160xf32>
    %c40 = arith.constant 40 : index
    %c0_4 = arith.constant 0 : index
    %6 = vector.load %arg3[%c40, %c0_4] : memref<144x160xf32, #tpu.memory_space<vmem>>, vector<32x32xf32>
    %c72 = arith.constant 72 : index
    %c0_5 = arith.constant 0 : index
    %7 = vector.load %arg3[%c72, %c0_5] : memref<144x160xf32, #tpu.memory_space<vmem>>, vector<1x32xf32>
    %c80 = arith.constant 80 : index
    %c0_6 = arith.constant 0 : index
    %8 = vector.load %arg3[%c80, %c0_6] : memref<144x160xf32, #tpu.memory_space<vmem>>, vector<64x32xf32>
    %cst = arith.constant dense<0.000000e+00> : vector<16x160xf32>
    %9 = tpu.matmul %1, %4, %cst {dimension_numbers = #tpu.dot_dimension_numbers<[1], [0], [0], [1], [0, 0, 1, 1], [], []>} : vector<16x32xf32>, vector<32x160xf32>, vector<16x160xf32> -> vector<16x160xf32>
    %10 = vector.broadcast %5 : vector<1x160xf32> to vector<16x160xf32>
    %11 = arith.addf %9, %10 : vector<16x160xf32>
    %12 = vector.extract_strided_slice %11 {offsets = [0, 0], sizes = [16, 32], strides = [1, 1]} : vector<16x160xf32> to vector<16x32xf32>
    %13 = arith.mulf %12, %2 : vector<16x32xf32>
    %14 = vector.extract_strided_slice %11 {offsets = [0, 96], sizes = [16, 32], strides = [1, 1]} : vector<16x160xf32> to vector<16x32xf32>
    %15 = arith.mulf %14, %3 : vector<16x32xf32>
    %16 = arith.addf %13, %15 : vector<16x32xf32>
    %17 = vector.extract_strided_slice %11 {offsets = [0, 32], sizes = [16, 32], strides = [1, 1]} : vector<16x160xf32> to vector<16x32xf32>
    %18 = arith.mulf %17, %2 : vector<16x32xf32>
    %19 = vector.extract_strided_slice %11 {offsets = [0, 128], sizes = [16, 32], strides = [1, 1]} : vector<16x160xf32> to vector<16x32xf32>
    %20 = arith.mulf %19, %3 : vector<16x32xf32>
    %21 = arith.addf %18, %20 : vector<16x32xf32>
    %22 = vector.extract_strided_slice %11 {offsets = [0, 64], sizes = [16, 32], strides = [1, 1]} : vector<16x160xf32> to vector<16x32xf32>
    %23 = tpu.concatenate %21, %21, %21, %21 in 0 : vector<16x32xf32>, vector<16x32xf32>, vector<16x32xf32>, vector<16x32xf32> -> vector<64x32xf32>
    %24 = arith.mulf %23, %8 : vector<64x32xf32>
    %25 = tpu.concatenate %22, %22, %22, %22 in 0 : vector<16x32xf32>, vector<16x32xf32>, vector<16x32xf32>, vector<16x32xf32> -> vector<64x32xf32>
    %26 = arith.mulf %25, %8 : vector<64x32xf32>
    %cst_7 = arith.constant dense<0.000000e+00> : vector<16x64xf32>
    %27 = tpu.matmul %16, %24, %cst_7 {dimension_numbers = #tpu.dot_dimension_numbers<[1], [1], [0], [0], [0, 0, 1, 0], [], []>} : vector<16x32xf32>, vector<64x32xf32>, vector<16x64xf32> -> vector<16x64xf32>
    %c0_8 = arith.constant 0 : index
    %c0_9 = arith.constant 0 : index
    %28 = vector.load %arg2[%c0_8, %c0_9] : memref<16x64xf32, #tpu.memory_space<vmem>>, vector<16x64xf32>
    %29 = arith.addf %27, %28 : vector<16x64xf32>
    %cst_10 = arith.constant dense<0xFF800000> : vector<16xf32>
    %30 = vector.multi_reduction <maximumf>, %29, %cst_10 [1] : vector<16x64xf32> to vector<16xf32>
    %31 = vector.shape_cast %30 : vector<16xf32> to vector<16x1xf32>
    %32 = vector.broadcast %31 : vector<16x1xf32> to vector<16x64xf32>
    %33 = arith.subf %29, %32 : vector<16x64xf32>
    %34 = math.exp %33 : vector<16x64xf32>
    %35 = tpu.concatenate %26, %8 in 1 : vector<64x32xf32>, vector<64x32xf32> -> vector<64x64xf32>
    %cst_11 = arith.constant dense<0.000000e+00> : vector<16x64xf32>
    %36 = tpu.matmul %34, %35, %cst_11 {dimension_numbers = #tpu.dot_dimension_numbers<[1], [0], [0], [1], [0, 0, 1, 1], [], []>} : vector<16x64xf32>, vector<64x64xf32>, vector<16x64xf32> -> vector<16x64xf32>
    %37 = vector.extract_strided_slice %36 {offsets = [0, 0], sizes = [16, 32], strides = [1, 1]} : vector<16x64xf32> to vector<16x32xf32>
    %38 = vector.extract_strided_slice %36 {offsets = [0, 32], sizes = [16, 32], strides = [1, 1]} : vector<16x64xf32> to vector<16x32xf32>
    %39 = tpu.reciprocal %38 : vector<16x32xf32> -> vector<16x32xf32>
    %40 = arith.mulf %37, %39 : vector<16x32xf32>
    %cst_12 = arith.constant dense<0.000000e+00> : vector<16x32xf32>
    %41 = tpu.matmul %40, %6, %cst_12 {dimension_numbers = #tpu.dot_dimension_numbers<[1], [0], [0], [1], [0, 0, 1, 1], [], []>} : vector<16x32xf32>, vector<32x32xf32>, vector<16x32xf32> -> vector<16x32xf32>
    %42 = vector.broadcast %7 : vector<1x32xf32> to vector<16x32xf32>
    %43 = arith.addf %41, %42 : vector<16x32xf32>
    %c0_13 = arith.constant 0 : index
    %c0_14 = arith.constant 0 : index
    %44 = vector.load %arg4[%c0_13, %c0_14] : memref<16x32xf32, #tpu.memory_space<vmem>>, vector<16x32xf32>
    tpu.vector_store %arg4[%c0_13, %c0_14], %43 {strides = array<i32>} : memref<16x32xf32, #tpu.memory_space<vmem>>, vector<16x32xf32>,
    return
  }
  func.func @transform_0(%arg0: i32) -> (i32, i32) {
    %c0_i32 = arith.constant 0 : i32
    %c0_i32_0 = arith.constant 0 : i32
    %c0_i32_1 = arith.constant 0 : i32
    return %c0_i32, %c0_i32_0 : i32, i32
  }
  func.func @transform_1(%arg0: i32) -> (i32, i32) {
    %c0_i32 = arith.constant 0 : i32
    %c0_i32_0 = arith.constant 0 : i32
    %c0_i32_1 = arith.constant 0 : i32
    return %c0_i32, %c0_i32_0 : i32, i32
  }
  func.func @transform_2(%arg0: i32) -> (i32, i32) {
    %c0_i32 = arith.constant 0 : i32
    %c0_i32_0 = arith.constant 0 : i32
    %c0_i32_1 = arith.constant 0 : i32
    return %c0_i32, %c0_i32_0 : i32, i32
  }
  func.func @transform_3(%arg0: i32) -> (i32, i32) {
    %c0_i32 = arith.constant 0 : i32
    %c0_i32_0 = arith.constant 0 : i32
    %c0_i32_1 = arith.constant 0 : i32
    return %c0_i32, %c0_i32_0 : i32, i32
  }
}

</mosaic_0001>

<llo_original>
// kernel: tpu_custom_call.1
$region0: #{tpu_custom_call.1}
  #allocation0 [shape = 'u32[]', space=smem, size = 0x4, offset = 0x4, fixed_abs, tag = 'smem constant byte address 0x4 - core index']
  #allocation1 [shape = 'u32[144,128]{1,0:T(1,128)}', space=vmem, size = 0x12000, scoped, tag = 'internal scratch']
  %s0 = inlined_call_operand.hbm [shape: f32[16,96], index: 0, kind: input, shape index: {}]
  %s1 = inlined_call_operand.hbm [shape: f32[16,64], index: 1, kind: input, shape index: {}]
  %s2 = inlined_call_operand.hbm [shape: f32[144,160], index: 2, kind: input, shape index: {}]
  %s3 = inlined_call_operand.hbm [shape: f32[16,32], index: 3, kind: output, shape index: {}]
  %s4 = sld [smem:[#allocation0]]
  $region34: #{tpu_custom_call.1} parent=0
    _
  %s6 = ssub.s32 1, %s4
  %s7 = scalar_select 0, %s6, %s4
  $region1: #{tpu_custom_call.1} parent=0
    #allocation2 [shape = 'u8[8192]{0}', space=vmem, size = 0x2000, scoped, tag = 'input window, operand 0, single buffered']
    #allocation3 [shape = 's32[1]{0}', space=sflag, size = 0x4, scoped, tag = 'scoped memory for tpu_custom_call.1']
    #allocation4 [shape = 's32[1]{0}', space=sflag, size = 0x4, scoped, tag = 'scoped memory for tpu_custom_call.1']
    #allocation5 [shape = 'u8[8192]{0}', space=vmem, size = 0x2000, scoped, tag = 'input window, operand 1, single buffered']
    #allocation6 [shape = 's32[1]{0}', space=sflag, size = 0x4, scoped, tag = 'scoped memory for tpu_custom_call.1']
    #allocation7 [shape = 'u8[147456]{0}', space=vmem, size = 0x24000, scoped, tag = 'input window, operand 2, single buffered']
    #allocation8 [shape = 'u8[8192]{0}', space=vmem, size = 0x2000, scoped, tag = 'output window, operand 0, single buffered']
    %8 = vsyncpa [#allocation3], 0
    %9 = vsyncpa [#allocation6], 0
    %10 = vsyncpa [#allocation4], 0
    // Predicated region
    $region2: #{tpu_custom_call.1} parent=1 // pred_check
      _
    $region3: #{tpu_custom_call.1} parent=1 // pred_check_branch
      %12 = sbr.rel (0) target = $region5
    $region4: #{tpu_custom_call.1} parent=1 // pred_region
      %s14 = ssub.s32 256, 256
      %15 = vsyncadd [#allocation3], %s14
      %s16 = sshll.u32 [#allocation2], 4
      %s17 = int_to_ptr.vmem [resolvable:$true] %s16
      %22 = dma.hbm_to_vmem [thread:$0]  %s0, 256, %s17, [#allocation3], 128, 128, 8
    $region5: #{tpu_custom_call.1} parent=1 // pred_fallthru
      _
    // Predicated region
    $region6: #{tpu_custom_call.1} parent=1 // pred_check
      _
    $region7: #{tpu_custom_call.1} parent=1 // pred_check_branch
      %24 = sbr.rel (0) target = $region9
    $region8: #{tpu_custom_call.1} parent=1 // pred_region
      %s26 = ssub.s32 256, 256
      %27 = vsyncadd [#allocation6], %s26
      %s28 = sshll.u32 [#allocation5], 4
      %s29 = int_to_ptr.vmem [resolvable:$true] %s28
      %34 = dma.hbm_to_vmem [thread:$0]  %s1, 256, %s29, [#allocation6], 128, 128, 8
    $region9: #{tpu_custom_call.1} parent=1 // pred_fallthru
      _
    // Predicated region
    $region10: #{tpu_custom_call.1} parent=1 // pred_check
      _
    $region11: #{tpu_custom_call.1} parent=1 // pred_check_branch
      %36 = sbr.rel (0) target = $region13
    $region12: #{tpu_custom_call.1} parent=1 // pred_region
      %s38 = ssub.s32 4608, 4608
      %39 = vsyncadd [#allocation6], %s38
      %s40 = sshll.u32 [#allocation7], 4
      %s41 = int_to_ptr.vmem [resolvable:$true] %s40
      %46 = dma.hbm_to_vmem [thread:$0]  %s2, 4608, %s41, [#allocation6], 256, 256, 16
    $region13: #{tpu_custom_call.1} parent=1 // pred_fallthru
      _
    // Predicated region
    $region14: #{tpu_custom_call.1} parent=1 // pred_check
      _
    $region15: #{tpu_custom_call.1} parent=1 // pred_check_branch
      %48 = sbr.rel (0) target = $region17
    $region16: #{tpu_custom_call.1} parent=1 // pred_region
      %49 = dma.done [#allocation3], 256
    $region17: #{tpu_custom_call.1} parent=1 // pred_fallthru
      _
    // Predicated region
    $region18: #{tpu_custom_call.1} parent=1 // pred_check
      _
    $region19: #{tpu_custom_call.1} parent=1 // pred_check_branch
      %51 = sbr.rel (0) target = $region21
    $region20: #{tpu_custom_call.1} parent=1 // pred_region
      %52 = dma.done [#allocation6], 256
    $region21: #{tpu_custom_call.1} parent=1 // pred_fallthru
      _
    // Predicated region
    $region22: #{tpu_custom_call.1} parent=1 // pred_check
      _
    $region23: #{tpu_custom_call.1} parent=1 // pred_check_branch
      %54 = sbr.rel (0) target = $region25
    $region24: #{tpu_custom_call.1} parent=1 // pred_region
      %55 = dma.done [#allocation6], 4608
    $region25: #{tpu_custom_call.1} parent=1 // pred_fallthru
      _
    %v56 = vld [vmem:[#allocation2] sm:$0xff]
    %v57 = vld [vmem:[#allocation2 + $0x8] sm:$0xff]
    %v58 = vld [vmem:[#allocation7] sm:$0xff]
    %v59 = vld [vmem:[#allocation7 + $0x8] sm:$0xff]
    %v60 = vld [vmem:[#allocation7 + $0x10] sm:$0xff]
    %v61 = vld [vmem:[#allocation7 + $0x18] sm:$0xff]
    %v62 = vld [vmem:[#allocation7 + $0x20] sm:$0xff]
    %v63 = vld [vmem:[#allocation7 + $0x28] sm:$0xff]
    %v64 = vld [vmem:[#allocation7 + $0x30] sm:$0xff]
    %v65 = vld [vmem:[#allocation7 + $0x38] sm:$0xff]
    %s66 = scalar_lea.vmem [#allocation7], 64
    %v67 = vld [vmem:[%s66] ss:$8 sm:$0x3]
    %v68 = vld [vmem:[#allocation7 + $0x50] sm:$0xff]
    %v69 = vld [vmem:[#allocation7 + $0x60] sm:$0xff]
    %v70 = vld [vmem:[#allocation7 + $0x70] sm:$0xff]
    %v71 = vld [vmem:[#allocation7 + $0x80] sm:$0xff]
    %v72 = vld [vmem:[#allocation7 + $0x90] ss:$0 sm:$0xff]
    %v73 = vld [vmem:[#allocation7 + $0xa0] sm:$0xff]
    %v74 = vld [vmem:[#allocation7 + $0xb0] sm:$0xff]
    %v75 = vld [vmem:[#allocation7 + $0xc0] sm:$0xff]
    %v76 = vld [vmem:[#allocation7 + $0xd0] sm:$0xff]
    %v77 = vld [vmem:[#allocation7 + $0xe0] sm:$0xff]
    %v78 = vld [vmem:[#allocation7 + $0xf0] sm:$0xff]
    %v79 = vld [vmem:[#allocation7 + $0x100] sm:$0xff]
    %v80 = vld [vmem:[#allocation7 + $0x110] sm:$0xff]
    %v82 = vlaneseq
    %v83 = vshrl.u32 %v82, 7
    %v84 = vsub.s32 0, %v83
    %v85 = vrot.slane %v67, %v84
    %v86 = vlaneseq
    %v87 = vshrl.u32 %v86, 7
    %v88 = vsub.s32 1, %v87
    %v89 = vrot.slane %v67, %v88
    %vm92 = vcmask 261120
    %v94 = vsel %vm92, %v56, 0
    %v97 = vsel %vm92, %v57, 0
    %99 = vmatprep.subr.mxu0 %v59
    %100 = vmatpush1.msra.mxu0 %v58
    %101 = vmatprep.subr.mxu0 %v61
    %102 = vmatpush1.msra.mxu0 %v60
    %103 = vmatprep.subr.mxu0 %v63
    %104 = vmatpush1.msra.mxu0 %v62
    %105 = vmatprep.subr.mxu0 %v65
    %106 = vmatpush1.msra.mxu0 %v64
    %107 = vmatprep.subr.mxu0 0.0
    %108 = vmatpush1.msra.mxu0 0.0
    %109 = vmatprep.subr.mxu0 0.0
    %110 = vmatpush1.msra.mxu0 0.0
    %111 = vmatprep.subr.mxu0 0.0
    %112 = vmatpush1.msra.mxu0 0.0
    %113 = vmatprep.subr.mxu0 0.0
    %114 = vmatpush1.msra.mxu0 0.0
    %115 = vmatprep.subr.mxu0 0.0
    %116 = vmatpush1.msra.mxu0 0.0
    %117 = vmatprep.subr.mxu0 0.0
    %118 = vmatpush1.msra.mxu0 0.0
    %119 = vmatprep.subr.mxu0 0.0
    %120 = vmatpush1.msra.mxu0 0.0
    %121 = vmatprep.subr.mxu0 0.0
    %122 = vmatpush1.msra.mxu0 0.0
    %123 = vmatprep.subr.mxu0 0.0
    %124 = vmatpush1.msra.mxu0 0.0
    %125 = vmatprep.subr.mxu0 0.0
    %126 = vmatpush1.msra.mxu0 0.0
    %127 = vmatprep.subr.mxu0 0.0
    %128 = vmatpush1.msra.mxu0 0.0
    %129 = vmatprep.subr.mxu0 0.0
    %130 = vmatpush1.msra.mxu0 0.0
    %131 = vmatprep.subr.mxu0 0.0
    %132 = vmatpush1.msra.mxu0 0.0
    %133 = vmatprep.subr.mxu0 0.0
    %134 = vmatpush1.msra.mxu0 0.0
    %135 = vmatprep.subr.mxu0 0.0
    %136 = vmatpush1.msra.mxu0 0.0
    %137 = vmatprep.subr.mxu0 0.0
    %138 = vmatpush1.msra.mxu0 0.0
    %139 = vmatprep.subr.mxu0 0.0
    %140 = vmatpush1.msra.mxu0 0.0
    %141 = vmatprep.subr.mxu0 0.0
    %142 = vmatpush1.msra.mxu0 0.0
    %143 = vmatprep.subr.mxu0 0.0
    %144 = vmatpush1.msra.mxu0 0.0
    %145 = vmatprep.subr.mxu0 0.0
    %146 = vmatpush1.msra.mxu0 0.0
    %147 = vmatprep.subr.mxu0 0.0
    %148 = vmatpush1.msra.mxu0 0.0
    %149 = vmatprep.subr.mxu0 0.0
    %150 = vmatpush1.msra.mxu0 0.0
    %151 = vmatprep.subr.mxu0 0.0
    %152 = vmatpush1.msra.mxu0 0.0
    %153 = vmatprep.subr.mxu0 0.0
    %154 = vmatpush1.msra.mxu0 0.0
    %155 = vmatprep.subr.mxu0 0.0
    %156 = vmatpush1.msra.mxu0 0.0
    %157 = vmatprep.subr.mxu0 0.0
    %158 = vmatpush1.msra.mxu0 0.0
    %159 = vmatprep.subr.mxu0 0.0
    %160 = vmatpush1.msra.mxu0 0.0
    %161 = vmatprep.subr.mxu0 0.0
    %162 = vmatpush1.msra.mxu0 0.0
    %163 = vmatprep.mubr.f32.mxu0 0.0
    %164 = vmatmul.mubr.f32.gmra.mrb[0].mxu0 %v94
    %v165 = vpop.f32.mrb[0].mxu0
    %v166 = vadd.f32 %v85, %v165
    %v167 = vpop.f32.mrb[0].mxu0
    %v168 = vadd.f32 %v89, %v167
    %169 = vmatprep.mubr.f32.mxu0 0.0
    %170 = vmatmul.mubr.f32.gmra.mrb[0].mxu0 %v97
    %v171 = vpop.f32.mrb[0].mxu0
    %v172 = vadd.f32 %v85, %v171
    %v173 = vpop.f32.mrb[0].mxu0
    %v174 = vadd.f32 %v89, %v173
    %175 = vdwg.mxu0
    %176 = vrot.lane.b32.xlu0 %v56, 96
    %v177 = vpop.permute.xlu0 %176
    %178 = vrot.lane.b32.xlu0 %v57, 96
    %v179 = vpop.permute.xlu0 %178
    %v182 = vmul.f32 %v166, %v177
    %v183 = vmul.f32 %v172, %v179
    %184 = vrot.lane.b32.xlu0 %v56, 32
    %v185 = vpop.permute.xlu0 %184
    %186 = vrot.lane.b32.xlu0 %v57, 32
    %v187 = vpop.permute.xlu0 %186
    %v190 = vmul.f32 %v166, %v185
    %v191 = vmul.f32 %v172, %v187
    %194 = vrot.lane.b32.xlu0 %v190, 32
    %v195 = vpop.permute.xlu0 %194
    %196 = vrot.lane.b32.xlu0 %v191, 32
    %v197 = vpop.permute.xlu0 %196
    %v200 = vadd.f32 %v182, %v195
    %v201 = vadd.f32 %v183, %v197
    %v202 = vmul.f32 %v166, %v56
    %v203 = vmul.f32 %v172, %v57
    %204 = vrot.lane.b32.xlu0 %v56, 64
    %v205 = vpop.permute.xlu0 %204
    %206 = vrot.lane.b32.xlu0 %v57, 64
    %v207 = vpop.permute.xlu0 %206
    %v210 = vmul.f32 %v168, %v205
    %v211 = vmul.f32 %v174, %v207
    %214 = vrot.lane.b32.xlu0 %v210, 32
    %v215 = vpop.permute.xlu0 %214
    %216 = vrot.lane.b32.xlu0 %v211, 32
    %v217 = vpop.permute.xlu0 %216
    %v220 = vadd.f32 %v202, %v215
    %v221 = vadd.f32 %v203, %v217
    %230 = vrot.lane.b32.xlu0 %v73, 32
    %v231 = vpop.permute.xlu0 %230
    %232 = vrot.lane.b32.xlu0 %v74, 32
    %v233 = vpop.permute.xlu0 %232
    %234 = vrot.lane.b32.xlu0 %v75, 32
    %v235 = vpop.permute.xlu0 %234
    %236 = vrot.lane.b32.xlu0 %v76, 32
    %v237 = vpop.permute.xlu0 %236
    %238 = vrot.lane.b32.xlu0 %v77, 32
    %v239 = vpop.permute.xlu0 %238
    %240 = vrot.lane.b32.xlu0 %v78, 32
    %v241 = vpop.permute.xlu0 %240
    %242 = vrot.lane.b32.xlu0 %v79, 32
    %v243 = vpop.permute.xlu0 %242
    %244 = vrot.lane.b32.xlu0 %v80, 32
    %v245 = vpop.permute.xlu0 %244
    %v254 = vmul.f32 %v220, %v231
    %v255 = vmul.f32 %v221, %v233
    %v256 = vmul.f32 %v220, %v235
    %v257 = vmul.f32 %v221, %v237
    %v258 = vmul.f32 %v220, %v239
    %v259 = vmul.f32 %v221, %v241
    %v260 = vmul.f32 %v220, %v243
    %v261 = vmul.f32 %v221, %v245
    %262 = vrot.lane.b32.xlu0 %v73, 64
    %v263 = vpop.permute.xlu0 %262
    %264 = vrot.lane.b32.xlu0 %v74, 64
    %v265 = vpop.permute.xlu0 %264
    %266 = vrot.lane.b32.xlu0 %v75, 64
    %v267 = vpop.permute.xlu0 %266
    %268 = vrot.lane.b32.xlu0 %v76, 64
    %v269 = vpop.permute.xlu0 %268
    %270 = vrot.lane.b32.xlu0 %v77, 64
    %v271 = vpop.permute.xlu0 %270
    %272 = vrot.lane.b32.xlu0 %v78, 64
    %v273 = vpop.permute.xlu0 %272
    %274 = vrot.lane.b32.xlu0 %v79, 64
    %v275 = vpop.permute.xlu0 %274
    %276 = vrot.lane.b32.xlu0 %v80, 64
    %v277 = vpop.permute.xlu0 %276
    %v286 = vmul.f32 %v166, %v263
    %v287 = vmul.f32 %v172, %v265
    %v288 = vmul.f32 %v166, %v267
    %v289 = vmul.f32 %v172, %v269
    %v290 = vmul.f32 %v166, %v271
    %v291 = vmul.f32 %v172, %v273
    %v292 = vmul.f32 %v166, %v275
    %v293 = vmul.f32 %v172, %v277
    %v294 = vld [vmem:[#allocation5] sm:$0xff]
    %v295 = vld [vmem:[#allocation5 + $0x8] sm:$0xff]
    %304 = vrot.lane.b32.xlu0 %v254, 96
    %v305 = vpop.permute.xlu0 %304
    %306 = vrot.lane.b32.xlu0 %v255, 96
    %v307 = vpop.permute.xlu0 %306
    %308 = vrot.lane.b32.xlu0 %v256, 96
    %v309 = vpop.permute.xlu0 %308
    %310 = vrot.lane.b32.xlu0 %v257, 96
    %v311 = vpop.permute.xlu0 %310
    %312 = vrot.lane.b32.xlu0 %v258, 96
    %v313 = vpop.permute.xlu0 %312
    %314 = vrot.lane.b32.xlu0 %v259, 96
    %v315 = vpop.permute.xlu0 %314
    %316 = vrot.lane.b32.xlu0 %v260, 96
    %v317 = vpop.permute.xlu0 %316
    %318 = vrot.lane.b32.xlu0 %v261, 96
    %v319 = vpop.permute.xlu0 %318
    %v321 = vsel %vm92, %v200, 0
    %v324 = vsel %vm92, %v201, 0
    %v326 = vsel %vm92, %v305, 0
    %v328 = vsel %vm92, %v307, 0
    %v330 = vsel %vm92, %v309, 0
    %v332 = vsel %vm92, %v311, 0
    %v334 = vsel %vm92, %v313, 0
    %v336 = vsel %vm92, %v315, 0
    %v338 = vsel %vm92, %v317, 0
    %v340 = vsel %vm92, %v319, 0
    %342 = vmatprep.subr.mxu0 0.0
    %343 = vmatpush1.xpose.msra.mxu0 %v326
    %344 = vmatprep.subr.mxu0 0.0
    %345 = vmatpush1.xpose.msra.mxu0 %v328
    %346 = vmatprep.subr.mxu0 0.0
    %347 = vmatpush1.xpose.msra.mxu0 %v330
    %348 = vmatprep.subr.mxu0 0.0
    %349 = vmatpush1.xpose.msra.mxu0 %v332
    %350 = vmatprep.subr.mxu0 0.0
    %351 = vmatpush1.xpose.msra.mxu0 %v334
    %352 = vmatprep.subr.mxu0 0.0
    %353 = vmatpush1.xpose.msra.mxu0 %v336
    %354 = vmatprep.subr.mxu0 0.0
    %355 = vmatpush1.xpose.msra.mxu0 %v338
    %356 = vmatprep.subr.mxu0 0.0
    %357 = vmatpush1.xpose.msra.mxu0 %v340
    %358 = vmatprep.subr.mxu0 0.0
    %359 = vmatpush1.xpose.msra.mxu0 0.0
    %360 = vmatprep.subr.mxu0 0.0
    %361 = vmatpush1.xpose.msra.mxu0 0.0
    %362 = vmatprep.subr.mxu0 0.0
    %363 = vmatpush1.xpose.msra.mxu0 0.0
    %364 = vmatprep.subr.mxu0 0.0
    %365 = vmatpush1.xpose.msra.mxu0 0.0
    %366 = vmatprep.subr.mxu0 0.0
    %367 = vmatpush1.xpose.msra.mxu0 0.0
    %368 = vmatprep.subr.mxu0 0.0
    %369 = vmatpush1.xpose.msra.mxu0 0.0
    %370 = vmatprep.subr.mxu0 0.0
    %371 = vmatpush1.xpose.msra.mxu0 0.0
    %372 = vmatprep.subr.mxu0 0.0
    %373 = vmatpush1.xpose.msra.mxu0 0.0
    %374 = vmatprep.subr.mxu0 0.0
    %375 = vmatpush1.xpose.msra.mxu0 0.0
    %376 = vmatprep.subr.mxu0 0.0
    %377 = vmatpush1.xpose.msra.mxu0 0.0
    %378 = vmatprep.subr.mxu0 0.0
    %379 = vmatpush1.xpose.msra.mxu0 0.0
    %380 = vmatprep.subr.mxu0 0.0
    %381 = vmatpush1.xpose.msra.mxu0 0.0
    %382 = vmatprep.subr.mxu0 0.0
    %383 = vmatpush1.xpose.msra.mxu0 0.0
    %384 = vmatprep.subr.mxu0 0.0
    %385 = vmatpush1.xpose.msra.mxu0 0.0
    %386 = vmatprep.subr.mxu0 0.0
    %387 = vmatpush1.xpose.msra.mxu0 0.0
    %388 = vmatprep.subr.mxu0 0.0
    %389 = vmatpush1.xpose.msra.mxu0 0.0
    %390 = vmatprep.subr.mxu0 0.0
    %391 = vmatpush1.xpose.msra.mxu0 0.0
    %392 = vmatprep.subr.mxu0 0.0
    %393 = vmatpush1.xpose.msra.mxu0 0.0
    %394 = vmatprep.subr.mxu0 0.0
    %395 = vmatpush1.xpose.msra.mxu0 0.0
    %396 = vmatprep.subr.mxu0 0.0
    %397 = vmatpush1.xpose.msra.mxu0 0.0
    %398 = vmatprep.subr.mxu0 0.0
    %399 = vmatpush1.xpose.msra.mxu0 0.0
    %400 = vmatprep.subr.mxu0 0.0
    %401 = vmatpush1.xpose.msra.mxu0 0.0
    %402 = vmatprep.subr.mxu0 0.0
    %403 = vmatpush1.xpose.msra.mxu0 0.0
    %404 = vmatprep.subr.mxu0 0.0
    %405 = vmatpush1.xpose.msra.mxu0 0.0
    %406 = vmatprep.mubr.f32.mxu0 0.0
    %407 = vmatmul.mubr.f32.gmra.mrb[0].mxu0 %v321
    %v408 = vpop.f32.mrb[0].mxu0
    %v409 = vadd.f32 %v294, %v408
    %v410 = vpop.f32.mrb[0].mxu0
    %411 = vmatprep.mubr.f32.mxu0 0.0
    %412 = vmatmul.mubr.f32.gmra.mrb[0].mxu0 %v324
    %v413 = vpop.f32.mrb[0].mxu0
    %v414 = vadd.f32 %v295, %v413
    %v415 = vpop.f32.mrb[0].mxu0
    %416 = vdwg.mxu0
    %vm417 = vcmask 523264
    %v418 = vsel %vm417, %v409, -inf
    %419 = vmax.xlane.f32.xlu0 %v418
    %v420 = vpop.xlane.xlu0 %419
    %v421 = vsel %vm417, %v414, -inf
    %422 = vmax.xlane.f32.xlu0 %v421
    %v423 = vpop.xlane.xlu0 %422
    %v424 = vsub.f32 %v409, %v420
    %v425 = vsub.f32 %v414, %v423
    %v426 = vmul.f32 %v424, 1.442695
    %v427 = vpow.pop %v426
    %v428 = vmul.f32 %v425, 1.442695
    %v429 = vpow.pop %v428
    %438 = vrot.lane.b32.xlu0 %v286, 64
    %v439 = vpop.permute.xlu0 %438
    %440 = vrot.lane.b32.xlu0 %v287, 64
    %v441 = vpop.permute.xlu0 %440
    %442 = vrot.lane.b32.xlu0 %v288, 64
    %v443 = vpop.permute.xlu0 %442
    %444 = vrot.lane.b32.xlu0 %v289, 64
    %v445 = vpop.permute.xlu0 %444
    %446 = vrot.lane.b32.xlu0 %v290, 64
    %v447 = vpop.permute.xlu0 %446
    %448 = vrot.lane.b32.xlu0 %v291, 64
    %v449 = vpop.permute.xlu0 %448
    %450 = vrot.lane.b32.xlu0 %v292, 64
    %v451 = vpop.permute.xlu0 %450
    %452 = vrot.lane.b32.xlu0 %v293, 64
    %v453 = vpop.permute.xlu0 %452
    %v462 = vsel %vm92, %v439, %v231
    %v463 = vsel %vm92, %v441, %v233
    %v464 = vsel %vm92, %v443, %v235
    %v465 = vsel %vm92, %v445, %v237
    %v466 = vsel %vm92, %v447, %v239
    %v467 = vsel %vm92, %v449, %v241
    %v468 = vsel %vm92, %v451, %v243
    %v469 = vsel %vm92, %v453, %v245
    %v471 = vsel %vm417, %v427, 0
    %v474 = vsel %vm417, %v429, 0
    %476 = vmatprep.subr.mxu0 0.0
    %477 = vmatpush1.msra.mxu0 %v462
    %478 = vmatprep.subr.mxu0 0.0
    %479 = vmatpush1.msra.mxu0 %v463
    %480 = vmatprep.subr.mxu0 0.0
    %481 = vmatpush1.msra.mxu0 %v464
    %482 = vmatprep.subr.mxu0 0.0
    %483 = vmatpush1.msra.mxu0 %v465
    %484 = vmatprep.subr.mxu0 0.0
    %485 = vmatpush1.msra.mxu0 %v466
    %486 = vmatprep.subr.mxu0 0.0
    %487 = vmatpush1.msra.mxu0 %v467
    %488 = vmatprep.subr.mxu0 0.0
    %489 = vmatpush1.msra.mxu0 %v468
    %490 = vmatprep.subr.mxu0 0.0
    %491 = vmatpush1.msra.mxu0 %v469
    %492 = vmatprep.subr.mxu0 0.0
    %493 = vmatpush1.msra.mxu0 0.0
    %494 = vmatprep.subr.mxu0 0.0
    %495 = vmatpush1.msra.mxu0 0.0
    %496 = vmatprep.subr.mxu0 0.0
    %497 = vmatpush1.msra.mxu0 0.0
    %498 = vmatprep.subr.mxu0 0.0
    %499 = vmatpush1.msra.mxu0 0.0
    %500 = vmatprep.subr.mxu0 0.0
    %501 = vmatpush1.msra.mxu0 0.0
    %502 = vmatprep.subr.mxu0 0.0
    %503 = vmatpush1.msra.mxu0 0.0
    %504 = vmatprep.subr.mxu0 0.0
    %505 = vmatpush1.msra.mxu0 0.0
    %506 = vmatprep.subr.mxu0 0.0
    %507 = vmatpush1.msra.mxu0 0.0
    %508 = vmatprep.subr.mxu0 0.0
    %509 = vmatpush1.msra.mxu0 0.0
    %510 = vmatprep.subr.mxu0 0.0
    %511 = vmatpush1.msra.mxu0 0.0
    %512 = vmatprep.subr.mxu0 0.0
    %513 = vmatpush1.msra.mxu0 0.0
    %514 = vmatprep.subr.mxu0 0.0
    %515 = vmatpush1.msra.mxu0 0.0
    %516 = vmatprep.subr.mxu0 0.0
    %517 = vmatpush1.msra.mxu0 0.0
    %518 = vmatprep.subr.mxu0 0.0
    %519 = vmatpush1.msra.mxu0 0.0
    %520 = vmatprep.subr.mxu0 0.0
    %521 = vmatpush1.msra.mxu0 0.0
    %522 = vmatprep.subr.mxu0 0.0
    %523 = vmatpush1.msra.mxu0 0.0
    %524 = vmatprep.subr.mxu0 0.0
    %525 = vmatpush1.msra.mxu0 0.0
    %526 = vmatprep.subr.mxu0 0.0
    %527 = vmatpush1.msra.mxu0 0.0
    %528 = vmatprep.subr.mxu0 0.0
    %529 = vmatpush1.msra.mxu0 0.0
    %530 = vmatprep.subr.mxu0 0.0
    %531 = vmatpush1.msra.mxu0 0.0
    %532 = vmatprep.subr.mxu0 0.0
    %533 = vmatpush1.msra.mxu0 0.0
    %534 = vmatprep.subr.mxu0 0.0
    %535 = vmatpush1.msra.mxu0 0.0
    %536 = vmatprep.subr.mxu0 0.0
    %537 = vmatpush1.msra.mxu0 0.0
    %538 = vmatprep.subr.mxu0 0.0
    %539 = vmatpush1.msra.mxu0 0.0
    %540 = vmatprep.mubr.f32.mxu0 0.0
    %541 = vmatmul.mubr.f32.gmra.mrb[0].mxu0 %v471
    %v542 = vpop.f32.mrb[0].mxu0
    %v543 = vadd.f32 0.0, %v542
    %v544 = vpop.f32.mrb[0].mxu0
    %545 = vmatprep.mubr.f32.mxu0 0.0
    %546 = vmatmul.mubr.f32.gmra.mrb[0].mxu0 %v474
    %v547 = vpop.f32.mrb[0].mxu0
    %v548 = vadd.f32 0.0, %v547
    %v549 = vpop.f32.mrb[0].mxu0
    %550 = vdwg.mxu0
    %v551 = vrcp.pop %v543
    %v552 = vrcp.pop %v548
    %555 = vrot.lane.b32.xlu0 %v551, 96
    %v556 = vpop.permute.xlu0 %555
    %557 = vrot.lane.b32.xlu0 %v552, 96
    %v558 = vpop.permute.xlu0 %557
    %v561 = vmul.f32 %v543, %v556
    %v562 = vmul.f32 %v548, %v558
    %v564 = vsel %vm92, %v561, 0
    %v567 = vsel %vm92, %v562, 0
    %569 = vmatprep.subr.mxu0 0.0
    %570 = vmatpush1.msra.mxu0 %v68
    %571 = vmatprep.subr.mxu0 0.0
    %572 = vmatpush1.msra.mxu0 %v69
    %573 = vmatprep.subr.mxu0 0.0
    %574 = vmatpush1.msra.mxu0 %v70
    %575 = vmatprep.subr.mxu0 0.0
    %576 = vmatpush1.msra.mxu0 %v71
    %577 = vmatprep.subr.mxu0 0.0
    %578 = vmatpush1.msra.mxu0 0.0
    %579 = vmatprep.subr.mxu0 0.0
    %580 = vmatpush1.msra.mxu0 0.0
    %581 = vmatprep.subr.mxu0 0.0
    %582 = vmatpush1.msra.mxu0 0.0
    %583 = vmatprep.subr.mxu0 0.0
    %584 = vmatpush1.msra.mxu0 0.0
    %585 = vmatprep.subr.mxu0 0.0
    %586 = vmatpush1.msra.mxu0 0.0
    %587 = vmatprep.subr.mxu0 0.0
    %588 = vmatpush1.msra.mxu0 0.0
    %589 = vmatprep.subr.mxu0 0.0
    %590 = vmatpush1.msra.mxu0 0.0
    %591 = vmatprep.subr.mxu0 0.0
    %592 = vmatpush1.msra.mxu0 0.0
    %593 = vmatprep.subr.mxu0 0.0
    %594 = vmatpush1.msra.mxu0 0.0
    %595 = vmatprep.subr.mxu0 0.0
    %596 = vmatpush1.msra.mxu0 0.0
    %597 = vmatprep.subr.mxu0 0.0
    %598 = vmatpush1.msra.mxu0 0.0
    %599 = vmatprep.subr.mxu0 0.0
    %600 = vmatpush1.msra.mxu0 0.0
    %601 = vmatprep.subr.mxu0 0.0
    %602 = vmatpush1.msra.mxu0 0.0
    %603 = vmatprep.subr.mxu0 0.0
    %604 = vmatpush1.msra.mxu0 0.0
    %605 = vmatprep.subr.mxu0 0.0
    %606 = vmatpush1.msra.mxu0 0.0
    %607 = vmatprep.subr.mxu0 0.0
    %608 = vmatpush1.msra.mxu0 0.0
    %609 = vmatprep.subr.mxu0 0.0
    %610 = vmatpush1.msra.mxu0 0.0
    %611 = vmatprep.subr.mxu0 0.0
    %612 = vmatpush1.msra.mxu0 0.0
    %613 = vmatprep.subr.mxu0 0.0
    %614 = vmatpush1.msra.mxu0 0.0
    %615 = vmatprep.subr.mxu0 0.0
    %616 = vmatpush1.msra.mxu0 0.0
    %617 = vmatprep.subr.mxu0 0.0
    %618 = vmatpush1.msra.mxu0 0.0
    %619 = vmatprep.subr.mxu0 0.0
    %620 = vmatpush1.msra.mxu0 0.0
    %621 = vmatprep.subr.mxu0 0.0
    %622 = vmatpush1.msra.mxu0 0.0
    %623 = vmatprep.subr.mxu0 0.0
    %624 = vmatpush1.msra.mxu0 0.0
    %625 = vmatprep.subr.mxu0 0.0
    %626 = vmatpush1.msra.mxu0 0.0
    %627 = vmatprep.subr.mxu0 0.0
    %628 = vmatpush1.msra.mxu0 0.0
    %629 = vmatprep.subr.mxu0 0.0
    %630 = vmatpush1.msra.mxu0 0.0
    %631 = vmatprep.subr.mxu0 0.0
    %632 = vmatpush1.msra.mxu0 0.0
    %633 = vmatprep.mubr.f32.mxu0 0.0
    %634 = vmatmul.mubr.f32.gmra.mrb[0].mxu0 %v564
    %v635 = vpop.f32.mrb[0].mxu0
    %v636 = vadd.f32 %v72, %v635
    %v637 = vpop.f32.mrb[0].mxu0
    %638 = vmatprep.mubr.f32.mxu0 0.0
    %639 = vmatmul.mubr.f32.gmra.mrb[0].mxu0 %v567
    %v640 = vpop.f32.mrb[0].mxu0
    %v641 = vadd.f32 %v72, %v640
    %v642 = vpop.f32.mrb[0].mxu0
    %643 = vdwg.mxu0
    %644 = vst.msk [vmem:[#allocation8] sm:$0xff] %vm92, %v636
    %645 = vst.msk [vmem:[#allocation8 + $0x8] sm:$0xff] %vm92, %v641
    // Predicated region
    $region26: #{tpu_custom_call.1} parent=1 // pred_check
      _
    $region27: #{tpu_custom_call.1} parent=1 // pred_check_branch
      %647 = sbr.rel (0) target = $region29
    $region28: #{tpu_custom_call.1} parent=1 // pred_region
      %s649 = ssub.s32 256, 256
      %650 = vsyncadd [#allocation4], %s649
      %s651 = sshll.u32 [#allocation8], 4
      %s652 = int_to_ptr.vmem [resolvable:$true] %s651
      %657 = dma.vmem_to_hbm [thread:$0]  %s652, 256, %s3, [#allocation4], 128, 128, 8
    $region29: #{tpu_custom_call.1} parent=1 // pred_fallthru
      _
    // Predicated region
    $region30: #{tpu_custom_call.1} parent=1 // pred_check
      _
    $region31: #{tpu_custom_call.1} parent=1 // pred_check_branch
      %659 = sbr.rel (0) target = $region33
    $region32: #{tpu_custom_call.1} parent=1 // pred_region
      %660 = dma.done [#allocation4], 256
    $region33: #{tpu_custom_call.1} parent=1 // pred_fallthru
      _
    %661 = vsyncpa [#allocation3], 1
    %662 = vsyncpa [#allocation6], 1
    %663 = vsyncpa [#allocation4], 1

</llo_original>
